<compile_context>
chip_gen: v6e
topology: v6e:2x2x1
jax: 0.10.0
libtpu: 0.0.40
codegen_flags: <defaults>
</compile_context>

<pallas_src>
import numpy as np
import jax
import jax.numpy as jnp
from jax.experimental import pallas as pl
from jax.experimental.pallas import tpu as pltpu

R_PAD = 128  # lane-dense width for the resident ToRGB weight operand (output stays narrow)


def _leaky_relu(x, slope=0.2):
    return jnp.where(x > 0, x, slope * x)


def linear_skip_prog_kernel(x_ref, gain_ref, bias_ref,
                            w1_ref, b1_ref,
                            wn_ref, bn_ref,
                            wrp_ref, brs_ref,
                            out_ref):
    N = wn_ref.shape[0]
    R = out_ref.shape[-1]

    x = x_ref[0]                                             # (TP, D_in) bf16 (cast in wrapper)

    # ---- CLNLayer: Linear -> LayerNorm(eps=1e-5, no affine) -> style gain/bias -> LeakyReLU
    h = jnp.dot(x, w1_ref[...], preferred_element_type=jnp.float32) + b1_ref[...]   # (TP, H) f32
    mean = jnp.mean(h, axis=-1, keepdims=True)
    var = jnp.mean((h - mean) ** 2, axis=-1, keepdims=True)
    h = (h - mean) * jax.lax.rsqrt(var + 1e-5)
    # NOTE: if P % TILE_P != 0, padded rows of the last tile hold garbage; the per-row
    # LayerNorm keeps that garbage confined to rows Pallas discards on writeback.
    h = h * gain_ref[0] + bias_ref[0]                        # (1,H) broadcast, precomputed in wrapper
    h = _leaky_relu(h)

    # ---- progressive Linear blocks + ToRGB skip accumulation (f32 register accumulator)
    rgb = None
    for i in range(N):                                       # static, small trip count (<= 6)
        h = jnp.dot(h.astype(jnp.bfloat16), wn_ref[i],
                    preferred_element_type=jnp.float32) + bn_ref[i]
        h = _leaky_relu(h)
        t = jnp.dot(h.astype(jnp.bfloat16), wrp_ref[i],      # (TP, R_PAD) f32, lane-dense weights
                    preferred_element_type=jnp.float32)
        rgb = t if rgb is None else rgb + t

    # narrow write: (TP, R) with R equal to the full last dim -> legal block, ~42x less HBM
    out_ref[0] = jnp.tanh(rgb[:, :R] + brs_ref[...])


def _num_blocks(img_size):
    all_names = ["32", "64", "128", "256", "512", "1024"]
    key = str(2 ** int(np.log2(img_size)))
    return all_names.index(key) + 1


def _choose_tile_p(P, B, tp_max=4096):
    # Balance tiles (avoid a nearly-empty last tile), round to a multiple of 8 sublanes,
    # cap at tp_max, and guarantee >= 2 grid steps along a parallel axis when B == 1 so
    # both v7x TensorCores get work (free on single-TC v5e/v6e).
    min_tiles = 2 if B == 1 else 1
    n_tiles = max(min_tiles, -(-P // tp_max))
    tp = -(-P // n_tiles)
    tp = -(-tp // 8) * 8
    return P if tp > P else tp          # tp == P (full dim) is always a legal block


def _vmem_limit_bytes(TP, D_in, H, N, R):
    # Resident weights (bf16 matmul operands + f32 biases), double-buffered by Pallas.
    weights = 2 * ((D_in * H + N * H * H + N * H * R_PAD) * 2 + (H + N * H + R) * 4)
    per_tile = (
        2 * TP * D_in * 2       # x tile, bf16, double-buffered
        + 2 * TP * R * 4        # narrow out tile, f32, double-buffered
        + 4 * 2 * H * 4         # gain/bias per-batch tiles, double-buffered
        + 8 * TP * H * 4        # f32 intermediates (h, norm temps, live copies)
        + TP * R_PAD * 4        # rgb accumulator
    )
    budget = 2 * (weights + per_tile)   # 2x headroom for compiler temps / spills
    return int(min(max(budget, 16 * 1024 * 1024), 40 * 1024 * 1024))


def linear_skip_prog_forward(x, style, params, img_size):
    """x: (B, P, D_in) f32, style: (B, S) f32.  Returns (B, P, R) f32."""
    B, P, D_in = x.shape
    H = params["w1"].shape[1]
    R = params["wr"].shape[2]
    N = _num_blocks(img_size)
    TP = _choose_tile_p(P, B)

    # ---- wrapper-side precompute (hoisted out of the kernel) ----
    # style gain/bias: one lane-efficient batched matmul over all B
    gain = (style @ params["wg"] + params["bg"] + 1.0).reshape(B, 1, H).astype(jnp.float32)
    bias = (style @ params["wb"] + params["bb"]).reshape(B, 1, H).astype(jnp.float32)

    # bf16 inputs/weights for MXU; biases stay f32 (added post f32 accumulation)
    x_bf = x.astype(jnp.bfloat16)
    w1 = params["w1"].astype(jnp.bfloat16)
    b1 = params["b1"].astype(jnp.float32)
    wn = params["wn"][:N].astype(jnp.bfloat16)               # (N, H, H)
    bn = params["bn"][:N].astype(jnp.float32)                # (N, 1, H)

    # lane-dense ToRGB weights (zero-padded R -> 128 for the matmul operand only);
    # biases are summed across blocks (skip-add algebra) and stay narrow f32.
    wr_pad = jnp.pad(params["wr"][:N], ((0, 0), (0, 0), (0, R_PAD - R))).astype(jnp.bfloat16)
    br_sum = jnp.sum(params["br"][:N], axis=0).astype(jnp.float32)   # (1, R)

    whole = lambda *shape: pl.BlockSpec(shape, lambda b, p, _s=len(shape): (0,) * _s)

    grid_spec = pltpu.PrefetchScalarGridSpec(
        num_scalar_prefetch=0,
        grid=(B, pl.cdiv(P, TP)),
        in_specs=[
            pl.BlockSpec((1, TP, D_in), lambda b, p: (b, p, 0)),   # x tile (bf16)
            pl.BlockSpec((1, 1, H), lambda b, p: (b, 0, 0)),       # gain (per batch)
            pl.BlockSpec((1, 1, H), lambda b, p: (b, 0, 0)),       # bias (per batch)
            whole(D_in, H),                                        # w1
            whole(1, H),                                           # b1
            whole(N, H, H),                                        # wn
            whole(N, 1, H),                                        # bn
            whole(N, H, R_PAD),                                    # wr (lane-dense)
            whole(1, R),                                           # br_sum (narrow)
        ],
        out_specs=pl.BlockSpec((1, TP, R), lambda b, p: (b, p, 0)),  # narrow output
    )

    out = pl.pallas_call(
        linear_skip_prog_kernel,
        out_shape=jax.ShapeDtypeStruct((B, P, R), jnp.float32),
        grid_spec=grid_spec,
        compiler_params=pltpu.CompilerParams(
            dimension_semantics=("parallel", "parallel"),
            vmem_limit_bytes=_vmem_limit_bytes(TP, D_in, H, N, R),
        ),
    )(x_bf, gain, bias, w1, b1, wn, bn, wr_pad, br_sum)

    return out


def make_params(key, input_dim, hidden_dim, style_dim=256, rgb_dim=3, n_blocks_total=6):
    """Deterministic synthetic parameters (shapes follow the torch module's __init__)."""
    ks = jax.random.split(key, 12)
    H, S, R = hidden_dim, style_dim, rgb_dim

    def lin(k, fan_in, shape):
        bound = 1.0 / np.sqrt(fan_in)
        return jax.random.uniform(k, shape, jnp.float32, -bound, bound)

    freq_bound = np.sqrt(6.0 / hidden_dim) / 25.0  # frequency_init(25) on network linears

    return {
        "w1": lin(ks[0], input_dim, (input_dim, H)),
        "b1": lin(ks[1], input_dim, (1, H)),
        "wg": lin(ks[2], S, (S, H)),
        "bg": lin(ks[3], S, (1, H)),
        "wb": lin(ks[4], S, (S, H)),
        "bb": lin(ks[5], S, (1, H)),
        "wn": jax.random.uniform(ks[6], (n_blocks_total, H, H), jnp.float32,
                                 -freq_bound, freq_bound),
        "bn": lin(ks[7], H, (n_blocks_total, 1, H)),
        "wr": lin(ks[8], H, (n_blocks_total, H, R)),
        "br": lin(ks[9], H, (n_blocks_total, 1, R)),
    }


def reference_forward(x, style, params, img_size):
    """Pure-JAX f32 reference matching the torch forward, for correctness check."""
    n_blocks = _num_blocks(img_size)

    h = x @ params["w1"] + params["b1"]
    mean = jnp.mean(h, axis=-1, keepdims=True)
    var = jnp.mean((h - mean) ** 2, axis=-1, keepdims=True)
    hn = (h - mean) / jnp.sqrt(var + 1e-5)
    gain = (style @ params["wg"] + params["bg"] + 1.0)[:, None, :]
    bias = (style @ params["wb"] + params["bb"])[:, None, :]
    h = hn * gain + bias
    h = jnp.where(h > 0, h, 0.2 * h)

    rgb = 0.0
    for i in range(n_blocks):
        h = h @ params["wn"][i] + params["bn"][i]
        h = jnp.where(h > 0, h, 0.2 * h)
        rgb = rgb + (h @ params["wr"][i] + params["br"][i])
    return jnp.tanh(rgb)


if __name__ == "__main__":
    B, P = 2, 64            # batch, num_points
    INPUT_DIM = 3           # xyz points
    HIDDEN_DIM = 32
    STYLE_DIM = 256
    RGB_DIM = 3
    IMG_SIZE = 64           # -> runs blocks '32' and '64' (2 of 6)

    root = jax.random.PRNGKey(0)
    k_x, k_s, k_p = jax.random.split(root, 3)
    x = jax.random.normal(k_x, (B, P, INPUT_DIM), jnp.float32)
    style = jax.random.normal(k_s, (B, STYLE_DIM), jnp.float32)
    params = make_params(k_p, INPUT_DIM, HIDDEN_DIM, STYLE_DIM, RGB_DIM)

    out = linear_skip_prog_forward(x, style, params, IMG_SIZE)
    out = jax.block_until_ready(out)

    ref = reference_forward(x, style, params, IMG_SIZE)
    assert out.shape == (B, P, RGB_DIM)
    # bf16 MXU inputs (f32 accumulation) across up to 6 dependent matmuls -> loosened
    # tolerance vs. the f32 reference; accuracy drifts slightly with the block count N.
    np.testing.assert_allclose(np.asarray(out), np.asarray(ref), rtol=2e-2, atol=2e-2)

    print("KERNEL_OK")
</pallas_src>

<mosaic_0001>
module attributes {stable_mosaic.version = 11 : i64} {
  func.func @linear_skip_prog_kernel(%arg0: i32, %arg1: i32, %arg2: memref<1x64x3xbf16, #tpu.memory_space<vmem>>, %arg3: memref<1x1x32xf32, #tpu.memory_space<vmem>>, %arg4: memref<1x1x32xf32, #tpu.memory_space<vmem>>, %arg5: memref<3x32xbf16, #tpu.memory_space<vmem>>, %arg6: memref<1x32xf32, #tpu.memory_space<vmem>>, %arg7: memref<2x32x32xbf16, #tpu.memory_space<vmem>>, %arg8: memref<2x1x32xf32, #tpu.memory_space<vmem>>, %arg9: memref<2x32x128xbf16, #tpu.memory_space<vmem>>, %arg10: memref<1x3xf32, #tpu.memory_space<vmem>>, %arg11: memref<1x64x3xf32, #tpu.memory_space<vmem>>) attributes {dimension_semantics = [#tpu.dimension_semantics<parallel>, #tpu.dimension_semantics<parallel>], iteration_bounds = array<i64: 2, 1>, scalar_prefetch = 0 : i64, scratch_operands = 0 : i64, tpu.core_type = #tpu.core_type<tc>, window_params = [{transform_indices = @transform_0, window_bounds = array<i64: 1, 64, 3>}, {transform_indices = @transform_1, window_bounds = array<i64: 1, 1, 32>}, {transform_indices = @transform_2, window_bounds = array<i64: 1, 1, 32>}, {pipeline_mode = #tpu.pipeline_mode<synchronous>, transform_indices = @transform_3, window_bounds = array<i64: 3, 32>}, {pipeline_mode = #tpu.pipeline_mode<synchronous>, transform_indices = @transform_4, window_bounds = array<i64: 1, 32>}, {pipeline_mode = #tpu.pipeline_mode<synchronous>, transform_indices = @transform_5, window_bounds = array<i64: 2, 32, 32>}, {pipeline_mode = #tpu.pipeline_mode<synchronous>, transform_indices = @transform_6, window_bounds = array<i64: 2, 1, 32>}, {pipeline_mode = #tpu.pipeline_mode<synchronous>, transform_indices = @transform_7, window_bounds = array<i64: 2, 32, 128>}, {pipeline_mode = #tpu.pipeline_mode<synchronous>, transform_indices = @transform_8, window_bounds = array<i64: 1, 3>}, {transform_indices = @transform_9, window_bounds = array<i64: 1, 64, 3>}]} {
    %c0 = arith.constant 0 : index
    %c0_0 = arith.constant 0 : index
    %c0_1 = arith.constant 0 : index
    %0 = vector.load %arg2[%c0, %c0_0, %c0_1] : memref<1x64x3xbf16, #tpu.memory_space<vmem>>, vector<1x64x3xbf16>
    %1 = vector.shape_cast %0 : vector<1x64x3xbf16> to vector<64x3xbf16>
    %c0_2 = arith.constant 0 : index
    %c0_3 = arith.constant 0 : index
    %2 = vector.load %arg5[%c0_2, %c0_3] : memref<3x32xbf16, #tpu.memory_space<vmem>>, vector<3x32xbf16>
    %cst = arith.constant dense<0.000000e+00> : vector<64x32xf32>
    %3 = tpu.matmul %1, %2, %cst {dimension_numbers = #tpu.dot_dimension_numbers<[1], [0], [0], [1], [0, 0, 1, 1], [], []>} : vector<64x3xbf16>, vector<3x32xbf16>, vector<64x32xf32> -> vector<64x32xf32>
    %c0_4 = arith.constant 0 : index
    %c0_5 = arith.constant 0 : index
    %4 = vector.load %arg6[%c0_4, %c0_5] : memref<1x32xf32, #tpu.memory_space<vmem>>, vector<1x32xf32>
    %5 = vector.broadcast %4 : vector<1x32xf32> to vector<64x32xf32>
    %6 = arith.addf %3, %5 : vector<64x32xf32>
    %cst_6 = arith.constant dense<0.000000e+00> : vector<64xf32>
    %7 = vector.multi_reduction <add>, %6, %cst_6 [1] : vector<64x32xf32> to vector<64xf32>
    %8 = vector.shape_cast %7 : vector<64xf32> to vector<64x1xf32>
    %cst_7 = arith.constant 3.200000e+01 : f32
    %9 = vector.broadcast %cst_7 : f32 to vector<64x1xf32>
    %10 = arith.divf %8, %9 : vector<64x1xf32>
    %11 = vector.broadcast %10 : vector<64x1xf32> to vector<64x32xf32>
    %12 = arith.subf %6, %11 : vector<64x32xf32>
    %13 = arith.mulf %12, %12 : vector<64x32xf32>
    %cst_8 = arith.constant dense<0.000000e+00> : vector<64xf32>
    %14 = vector.multi_reduction <add>, %13, %cst_8 [1] : vector<64x32xf32> to vector<64xf32>
    %15 = vector.shape_cast %14 : vector<64xf32> to vector<64x1xf32>
    %cst_9 = arith.constant 3.200000e+01 : f32
    %16 = vector.broadcast %cst_9 : f32 to vector<64x1xf32>
    %17 = arith.divf %15, %16 : vector<64x1xf32>
    %18 = vector.broadcast %10 : vector<64x1xf32> to vector<64x32xf32>
    %19 = arith.subf %6, %18 : vector<64x32xf32>
    %cst_10 = arith.constant 9.99999974E-6 : f32
    %20 = vector.broadcast %cst_10 : f32 to vector<64x1xf32>
    %21 = arith.addf %17, %20 : vector<64x1xf32>
    %22 = math.rsqrt %21 : vector<64x1xf32>
    %23 = vector.broadcast %22 : vector<64x1xf32> to vector<64x32xf32>
    %24 = arith.mulf %19, %23 : vector<64x32xf32>
    %c0_11 = arith.constant 0 : index
    %c0_12 = arith.constant 0 : index
    %c0_13 = arith.constant 0 : index
    %25 = vector.load %arg3[%c0_11, %c0_12, %c0_13] : memref<1x1x32xf32, #tpu.memory_space<vmem>>, vector<1x1x32xf32>
    %26 = vector.shape_cast %25 : vector<1x1x32xf32> to vector<1x32xf32>
    %27 = vector.broadcast %26 : vector<1x32xf32> to vector<64x32xf32>
    %28 = arith.mulf %24, %27 : vector<64x32xf32>
    %c0_14 = arith.constant 0 : index
    %c0_15 = arith.constant 0 : index
    %c0_16 = arith.constant 0 : index
    %29 = vector.load %arg4[%c0_14, %c0_15, %c0_16] : memref<1x1x32xf32, #tpu.memory_space<vmem>>, vector<1x1x32xf32>
    %30 = vector.shape_cast %29 : vector<1x1x32xf32> to vector<1x32xf32>
    %31 = vector.broadcast %30 : vector<1x32xf32> to vector<64x32xf32>
    %32 = arith.addf %28, %31 : vector<64x32xf32>
    %cst_17 = arith.constant 0.000000e+00 : f32
    %33 = vector.broadcast %cst_17 : f32 to vector<64x32xf32>
    %34 = arith.cmpf ogt, %32, %33 : vector<64x32xf32>
    %cst_18 = arith.constant 2.000000e-01 : f32
    %35 = vector.broadcast %cst_18 : f32 to vector<64x32xf32>
    %36 = arith.mulf %35, %32 : vector<64x32xf32>
    %37 = arith.select %34, %32, %36 : vector<64x32xi1>, vector<64x32xf32>
    %38 = arith.truncf %37 : vector<64x32xf32> to vector<64x32xbf16>
    %c0_19 = arith.constant 0 : index
    %c0_20 = arith.constant 0 : index
    %c0_21 = arith.constant 0 : index
    %39 = vector.load %arg7[%c0_19, %c0_20, %c0_21] : memref<2x32x32xbf16, #tpu.memory_space<vmem>>, vector<1x32x32xbf16>
    %40 = vector.shape_cast %39 : vector<1x32x32xbf16> to vector<32x32xbf16>
    %cst_22 = arith.constant dense<0.000000e+00> : vector<64x32xf32>
    %41 = tpu.matmul %38, %40, %cst_22 {dimension_numbers = #tpu.dot_dimension_numbers<[1], [0], [0], [1], [0, 0, 1, 1], [], []>} : vector<64x32xbf16>, vector<32x32xbf16>, vector<64x32xf32> -> vector<64x32xf32>
    %c0_23 = arith.constant 0 : index
    %c0_24 = arith.constant 0 : index
    %c0_25 = arith.constant 0 : index
    %42 = vector.load %arg8[%c0_23, %c0_24, %c0_25] : memref<2x1x32xf32, #tpu.memory_space<vmem>>, vector<1x1x32xf32>
    %43 = vector.shape_cast %42 : vector<1x1x32xf32> to vector<1x32xf32>
    %44 = vector.broadcast %43 : vector<1x32xf32> to vector<64x32xf32>
    %45 = arith.addf %41, %44 : vector<64x32xf32>
    %cst_26 = arith.constant 0.000000e+00 : f32
    %46 = vector.broadcast %cst_26 : f32 to vector<64x32xf32>
    %47 = arith.cmpf ogt, %45, %46 : vector<64x32xf32>
    %cst_27 = arith.constant 2.000000e-01 : f32
    %48 = vector.broadcast %cst_27 : f32 to vector<64x32xf32>
    %49 = arith.mulf %48, %45 : vector<64x32xf32>
    %50 = arith.select %47, %45, %49 : vector<64x32xi1>, vector<64x32xf32>
    %51 = arith.truncf %50 : vector<64x32xf32> to vector<64x32xbf16>
    %c0_28 = arith.constant 0 : index
    %c0_29 = arith.constant 0 : index
    %c0_30 = arith.constant 0 : index
    %52 = vector.load %arg9[%c0_28, %c0_29, %c0_30] : memref<2x32x128xbf16, #tpu.memory_space<vmem>>, vector<1x32x128xbf16>
    %53 = vector.shape_cast %52 : vector<1x32x128xbf16> to vector<32x128xbf16>
    %cst_31 = arith.constant dense<0.000000e+00> : vector<64x128xf32>
    %54 = tpu.matmul %51, %53, %cst_31 {dimension_numbers = #tpu.dot_dimension_numbers<[1], [0], [0], [1], [0, 0, 1, 1], [], []>} : vector<64x32xbf16>, vector<32x128xbf16>, vector<64x128xf32> -> vector<64x128xf32>
    %55 = arith.truncf %50 : vector<64x32xf32> to vector<64x32xbf16>
    %c1 = arith.constant 1 : index
    %c0_32 = arith.constant 0 : index
    %c0_33 = arith.constant 0 : index
    %56 = vector.load %arg7[%c1, %c0_32, %c0_33] : memref<2x32x32xbf16, #tpu.memory_space<vmem>>, vector<1x32x32xbf16>
    %57 = vector.shape_cast %56 : vector<1x32x32xbf16> to vector<32x32xbf16>
    %cst_34 = arith.constant dense<0.000000e+00> : vector<64x32xf32>
    %58 = tpu.matmul %55, %57, %cst_34 {dimension_numbers = #tpu.dot_dimension_numbers<[1], [0], [0], [1], [0, 0, 1, 1], [], []>} : vector<64x32xbf16>, vector<32x32xbf16>, vector<64x32xf32> -> vector<64x32xf32>
    %c1_35 = arith.constant 1 : index
    %c0_36 = arith.constant 0 : index
    %c0_37 = arith.constant 0 : index
    %59 = vector.load %arg8[%c1_35, %c0_36, %c0_37] : memref<2x1x32xf32, #tpu.memory_space<vmem>>, vector<1x1x32xf32>
    %60 = vector.shape_cast %59 : vector<1x1x32xf32> to vector<1x32xf32>
    %61 = vector.broadcast %60 : vector<1x32xf32> to vector<64x32xf32>
    %62 = arith.addf %58, %61 : vector<64x32xf32>
    %cst_38 = arith.constant 0.000000e+00 : f32
    %63 = vector.broadcast %cst_38 : f32 to vector<64x32xf32>
    %64 = arith.cmpf ogt, %62, %63 : vector<64x32xf32>
    %cst_39 = arith.constant 2.000000e-01 : f32
    %65 = vector.broadcast %cst_39 : f32 to vector<64x32xf32>
    %66 = arith.mulf %65, %62 : vector<64x32xf32>
    %67 = arith.select %64, %62, %66 : vector<64x32xi1>, vector<64x32xf32>
    %68 = arith.truncf %67 : vector<64x32xf32> to vector<64x32xbf16>
    %c1_40 = arith.constant 1 : index
    %c0_41 = arith.constant 0 : index
    %c0_42 = arith.constant 0 : index
    %69 = vector.load %arg9[%c1_40, %c0_41, %c0_42] : memref<2x32x128xbf16, #tpu.memory_space<vmem>>, vector<1x32x128xbf16>
    %70 = vector.shape_cast %69 : vector<1x32x128xbf16> to vector<32x128xbf16>
    %cst_43 = arith.constant dense<0.000000e+00> : vector<64x128xf32>
    %71 = tpu.matmul %68, %70, %cst_43 {dimension_numbers = #tpu.dot_dimension_numbers<[1], [0], [0], [1], [0, 0, 1, 1], [], []>} : vector<64x32xbf16>, vector<32x128xbf16>, vector<64x128xf32> -> vector<64x128xf32>
    %72 = arith.addf %54, %71 : vector<64x128xf32>
    %73 = vector.extract_strided_slice %72 {offsets = [0, 0], sizes = [64, 3], strides = [1, 1]} : vector<64x128xf32> to vector<64x3xf32>
    %c0_44 = arith.constant 0 : index
    %c0_45 = arith.constant 0 : index
    %74 = vector.load %arg10[%c0_44, %c0_45] : memref<1x3xf32, #tpu.memory_space<vmem>>, vector<1x3xf32>
    %75 = vector.broadcast %74 : vector<1x3xf32> to vector<64x3xf32>
    %76 = arith.addf %73, %75 : vector<64x3xf32>
    %77 = math.tanh %76 : vector<64x3xf32>
    %c0_46 = arith.constant 0 : index
    %c0_47 = arith.constant 0 : index
    %c0_48 = arith.constant 0 : index
    %78 = vector.load %arg11[%c0_46, %c0_47, %c0_48] : memref<1x64x3xf32, #tpu.memory_space<vmem>>, vector<1x64x3xf32>
    %79 = vector.shape_cast %78 : vector<1x64x3xf32> to vector<64x3xf32>
    %80 = vector.shape_cast %77 : vector<64x3xf32> to vector<1x64x3xf32>
    tpu.vector_store %arg11[%c0_46, %c0_47, %c0_48], %80 {strides = array<i32>} : memref<1x64x3xf32, #tpu.memory_space<vmem>>, vector<1x64x3xf32>,
    return
  }
  func.func @transform_0(%arg0: i32, %arg1: i32) -> (i32, i32, i32) {
    %c0_i32 = arith.constant 0 : i32
    %c0_i32_0 = arith.constant 0 : i32
    return %arg0, %arg1, %c0_i32 : i32, i32, i32
  }
  func.func @transform_1(%arg0: i32, %arg1: i32) -> (i32, i32, i32) {
    %c0_i32 = arith.constant 0 : i32
    %c0_i32_0 = arith.constant 0 : i32
    %c0_i32_1 = arith.constant 0 : i32
    return %arg0, %c0_i32, %c0_i32_0 : i32, i32, i32
  }
  func.func @transform_2(%arg0: i32, %arg1: i32) -> (i32, i32, i32) {
    %c0_i32 = arith.constant 0 : i32
    %c0_i32_0 = arith.constant 0 : i32
    %c0_i32_1 = arith.constant 0 : i32
    return %arg0, %c0_i32, %c0_i32_0 : i32, i32, i32
  }
  func.func @transform_3(%arg0: i32, %arg1: i32) -> (i32, i32) {
    %c0_i32 = arith.constant 0 : i32
    %c0_i32_0 = arith.constant 0 : i32
    %c0_i32_1 = arith.constant 0 : i32
    return %c0_i32, %c0_i32_0 : i32, i32
  }
  func.func @transform_4(%arg0: i32, %arg1: i32) -> (i32, i32) {
    %c0_i32 = arith.constant 0 : i32
    %c0_i32_0 = arith.constant 0 : i32
    %c0_i32_1 = arith.constant 0 : i32
    return %c0_i32, %c0_i32_0 : i32, i32
  }
  func.func @transform_5(%arg0: i32, %arg1: i32) -> (i32, i32, i32) {
    %c0_i32 = arith.constant 0 : i32
    %c0_i32_0 = arith.constant 0 : i32
    %c0_i32_1 = arith.constant 0 : i32
    %c0_i32_2 = arith.constant 0 : i32
    return %c0_i32, %c0_i32_0, %c0_i32_1 : i32, i32, i32
  }
  func.func @transform_6(%arg0: i32, %arg1: i32) -> (i32, i32, i32) {
    %c0_i32 = arith.constant 0 : i32
    %c0_i32_0 = arith.constant 0 : i32
    %c0_i32_1 = arith.constant 0 : i32
    %c0_i32_2 = arith.constant 0 : i32
    return %c0_i32, %c0_i32_0, %c0_i32_1 : i32, i32, i32
  }
  func.func @transform_7(%arg0: i32, %arg1: i32) -> (i32, i32, i32) {
    %c0_i32 = arith.constant 0 : i32
    %c0_i32_0 = arith.constant 0 : i32
    %c0_i32_1 = arith.constant 0 : i32
    %c0_i32_2 = arith.constant 0 : i32
    return %c0_i32, %c0_i32_0, %c0_i32_1 : i32, i32, i32
  }
  func.func @transform_8(%arg0: i32, %arg1: i32) -> (i32, i32) {
    %c0_i32 = arith.constant 0 : i32
    %c0_i32_0 = arith.constant 0 : i32
    %c0_i32_1 = arith.constant 0 : i32
    return %c0_i32, %c0_i32_0 : i32, i32
  }
  func.func @transform_9(%arg0: i32, %arg1: i32) -> (i32, i32, i32) {
    %c0_i32 = arith.constant 0 : i32
    %c0_i32_0 = arith.constant 0 : i32
    return %arg0, %arg1, %c0_i32 : i32, i32, i32
  }
}

</mosaic_0001>

<llo_original>
// kernel: tpu_custom_call.1
$region0: #{tpu_custom_call.1}
  #allocation0 [shape = 'u32[]', space=smem, size = 0x4, offset = 0x4, fixed_abs, tag = 'smem constant byte address 0x4 - core index']
  #allocation1 [shape = 'u32[144,128]{1,0:T(1,128)}', space=vmem, size = 0x12000, scoped, tag = 'internal scratch']
  %s0 = inlined_call_operand.vmem [shape: bf16[2,64,3], index: 0, kind: input, shape index: {}]
  %s1 = inlined_call_operand.vmem [shape: f32[2,1,32], index: 1, kind: input, shape index: {}]
  %s2 = inlined_call_operand.vmem [shape: f32[2,1,32], index: 2, kind: input, shape index: {}]
  %s3 = inlined_call_operand.vmem [shape: bf16[3,32], index: 3, kind: input, shape index: {}]
  %s4 = inlined_call_operand.vmem [shape: f32[1,32], index: 4, kind: input, shape index: {}]
  %s5 = inlined_call_operand.vmem [shape: bf16[2,32,32], index: 5, kind: input, shape index: {}]
  %s6 = inlined_call_operand.vmem [shape: f32[2,1,32], index: 6, kind: input, shape index: {}]
  %s7 = inlined_call_operand.vmem [shape: bf16[2,32,128], index: 7, kind: input, shape index: {}]
  %s8 = inlined_call_operand.vmem [shape: f32[1,3], index: 8, kind: input, shape index: {}]
  %s9 = inlined_call_operand.vmem [shape: f32[2,64,3], index: 9, kind: output, shape index: {}]
  %s10 = sld [smem:[#allocation0]]
  $region69: #{tpu_custom_call.1} parent=0
    _
  %s12 = ssub.s32 1, %s10
  %s13 = scalar_select 0, %s12, %s10
  loop: start=0, step=1, limit=4
  $region2: #{tpu_custom_call.1} parent=0 // loop_pre_header
    _
  $region3: #{tpu_custom_call.1} parent=0 // loop_header
    %s15 = sphi 0, %s19
    %p16 = scmp.ge.s32.totalorder %s15, 4
    %s22 = sphi 0, %s34
    %s23 = sphi 0, %s30
    %s24 = sphi 0, %s22
    %s25 = sphi 0, %s23
    %s26 = sphi 0, %s24
    %s27 = sphi 0, %s25
    %s39 = sphi 0, %s41
    %s42 = sphi 0, %s39
    %s43 = sphi 0, %s42
    %s59 = sphi 0, %s43
    %s65 = sphi 0, %s67
    %s68 = sphi 0, %s65
    %s69 = sphi 0, %s68
    %s85 = sphi 0, %s69
    %s91 = sphi 0, %s93
    %s94 = sphi 0, %s91
    %s95 = sphi 0, %s94
    %s111 = sphi 0, %s95
    %s115 = sphi 0, %s115
    %s117 = sphi 0, %s115
    %s118 = sphi 0, %s117
    %s132 = sphi 0, %s118
    %s136 = sphi 0, %s136
    %s138 = sphi 0, %s136
    %s139 = sphi 0, %s138
    %s153 = sphi 0, %s139
    %s157 = sphi 0, %s157
    %s159 = sphi 0, %s157
    %s160 = sphi 0, %s159
    %s174 = sphi 0, %s160
    %s178 = sphi 0, %s178
    %s180 = sphi 0, %s178
    %s181 = sphi 0, %s180
    %s195 = sphi 0, %s181
    %s199 = sphi 0, %s199
    %s201 = sphi 0, %s199
    %s202 = sphi 0, %s201
    %s216 = sphi 0, %s202
    %s220 = sphi 0, %s220
    %s222 = sphi 0, %s220
    %s223 = sphi 0, %s222
    %s237 = sphi 0, %s223
    %s245 = sphi 0, %s247
    %s248 = sphi 0, %s245
    %s249 = sphi 0, %s248
    %s265 = sphi 0, %s249
  $region4: #{tpu_custom_call.1} parent=0 // loop_header_branch
    %18 = sbr.rel (%p16) target = $region8
  $region5: #{tpu_custom_call.1} parent=0 // loop_body
    %s20 = ssub.s32 %s15, 1
    %s21 = ssub.s32 %s15, 2
    %s28 = sadd.s32 1, %s23
    %p29 = scmp.ge.s32.totalorder %s28, 1
    %s30 = scalar_select %p29, 0, %s28
    %s31 = sadd.s32 1, %s22
    %s32 = scalar_select %p29, %s31, %s22
    %p33 = scmp.ge.s32.totalorder %s32, 2
    %s34 = scalar_select %p33, 0, %s32
    %s35 = ssub.s32 %s22, %s34
    %s36 = ssub.s32 %s23, %s30
    %s37 = sor.u32 %s35, %s36
    %p38 = scmp.eq.s32.totalorder %s37, 0
    %s40 = sadd.s32 %s39, 1
    %s41 = scalar_select %p38, %s39, %s40
    %p44 = pneg %p38
    %p45 = scmp.eq.s32.totalorder %s15, 1
    %p46 = por %p44, %p45
    %p47 = scmp.ne.s32.totalorder %s39, %s42
    %p48 = scmp.eq.s32.totalorder %s15, 0
    %p49 = por %p47, %p48
    %p50 = scmp.ne.s32.totalorder %s39, %s42
    %p51 = scmp.eq.s32.totalorder %s20, 1
    %p52 = por %p50, %p51
    %p53 = scmp.ne.s32.totalorder %s42, %s43
    %p54 = scmp.eq.s32.totalorder %s20, 0
    %p55 = por %p53, %p54
    %p56 = scmp.ne.s32.totalorder %s42, %s43
    %p57 = scmp.eq.s32.totalorder %s21, 1
    %p58 = por %p56, %p57
    %p60 = scmp.ne.s32.totalorder %s43, %s59
    %p61 = scmp.eq.s32.totalorder %s21, 0
    %p62 = por %p60, %p61
    %s63 = ssub.s32 %s22, %s34
    %p64 = scmp.eq.s32.totalorder %s63, 0
    %s66 = sadd.s32 %s65, 1
    %s67 = scalar_select %p64, %s65, %s66
    %p70 = pneg %p64
    %p71 = scmp.eq.s32.totalorder %s15, 1
    %p72 = por %p70, %p71
    %p73 = scmp.ne.s32.totalorder %s65, %s68
    %p74 = scmp.eq.s32.totalorder %s15, 0
    %p75 = por %p73, %p74
    %p76 = scmp.ne.s32.totalorder %s65, %s68
    %p77 = scmp.eq.s32.totalorder %s20, 1
    %p78 = por %p76, %p77
    %p79 = scmp.ne.s32.totalorder %s68, %s69
    %p80 = scmp.eq.s32.totalorder %s20, 0
    %p81 = por %p79, %p80
    %p82 = scmp.ne.s32.totalorder %s68, %s69
    %p83 = scmp.eq.s32.totalorder %s21, 1
    %p84 = por %p82, %p83
    %p86 = scmp.ne.s32.totalorder %s69, %s85
    %p87 = scmp.eq.s32.totalorder %s21, 0
    %p88 = por %p86, %p87
    %s89 = ssub.s32 %s22, %s34
    %p90 = scmp.eq.s32.totalorder %s89, 0
    %s92 = sadd.s32 %s91, 1
    %s93 = scalar_select %p90, %s91, %s92
    %p96 = pneg %p90
    %p97 = scmp.eq.s32.totalorder %s15, 1
    %p98 = por %p96, %p97
    %p99 = scmp.ne.s32.totalorder %s91, %s94
    %p100 = scmp.eq.s32.totalorder %s15, 0
    %p101 = por %p99, %p100
    %p102 = scmp.ne.s32.totalorder %s91, %s94
    %p103 = scmp.eq.s32.totalorder %s20, 1
    %p104 = por %p102, %p103
    %p105 = scmp.ne.s32.totalorder %s94, %s95
    %p106 = scmp.eq.s32.totalorder %s20, 0
    %p107 = por %p105, %p106
    %p108 = scmp.ne.s32.totalorder %s94, %s95
    %p109 = scmp.eq.s32.totalorder %s21, 1
    %p110 = por %p108, %p109
    %p112 = scmp.ne.s32.totalorder %s95, %s111
    %p113 = scmp.eq.s32.totalorder %s21, 0
    %p114 = por %p112, %p113
    %s116 = sadd.s32 %s115, 1
    %p119 = scmp.eq.s32.totalorder %s15, 1
    %p120 = scmp.ne.s32.totalorder %s115, %s117
    %p121 = scmp.eq.s32.totalorder %s15, 0
    %p122 = por %p120, %p121
    %p123 = scmp.ne.s32.totalorder %s115, %s117
    %p124 = scmp.eq.s32.totalorder %s20, 1
    %p125 = por %p123, %p124
    %p126 = scmp.ne.s32.totalorder %s117, %s118
    %p127 = scmp.eq.s32.totalorder %s20, 0
    %p128 = por %p126, %p127
    %p129 = scmp.ne.s32.totalorder %s117, %s118
    %p130 = scmp.eq.s32.totalorder %s21, 1
    %p131 = por %p129, %p130
    %p133 = scmp.ne.s32.totalorder %s118, %s132
    %p134 = scmp.eq.s32.totalorder %s21, 0
    %p135 = por %p133, %p134
    %s137 = sadd.s32 %s136, 1
    %p140 = scmp.eq.s32.totalorder %s15, 1
    %p141 = scmp.ne.s32.totalorder %s136, %s138
    %p142 = scmp.eq.s32.totalorder %s15, 0
    %p143 = por %p141, %p142
    %p144 = scmp.ne.s32.totalorder %s136, %s138
    %p145 = scmp.eq.s32.totalorder %s20, 1
    %p146 = por %p144, %p145
    %p147 = scmp.ne.s32.totalorder %s138, %s139
    %p148 = scmp.eq.s32.totalorder %s20, 0
    %p149 = por %p147, %p148
    %p150 = scmp.ne.s32.totalorder %s138, %s139
    %p151 = scmp.eq.s32.totalorder %s21, 1
    %p152 = por %p150, %p151
    %p154 = scmp.ne.s32.totalorder %s139, %s153
    %p155 = scmp.eq.s32.totalorder %s21, 0
    %p156 = por %p154, %p155
    %s158 = sadd.s32 %s157, 1
    %p161 = scmp.eq.s32.totalorder %s15, 1
    %p162 = scmp.ne.s32.totalorder %s157, %s159
    %p163 = scmp.eq.s32.totalorder %s15, 0
    %p164 = por %p162, %p163
    %p165 = scmp.ne.s32.totalorder %s157, %s159
    %p166 = scmp.eq.s32.totalorder %s20, 1
    %p167 = por %p165, %p166
    %p168 = scmp.ne.s32.totalorder %s159, %s160
    %p169 = scmp.eq.s32.totalorder %s20, 0
    %p170 = por %p168, %p169
    %p171 = scmp.ne.s32.totalorder %s159, %s160
    %p172 = scmp.eq.s32.totalorder %s21, 1
    %p173 = por %p171, %p172
    %p175 = scmp.ne.s32.totalorder %s160, %s174
    %p176 = scmp.eq.s32.totalorder %s21, 0
    %p177 = por %p175, %p176
    %s179 = sadd.s32 %s178, 1
    %p182 = scmp.eq.s32.totalorder %s15, 1
    %p183 = scmp.ne.s32.totalorder %s178, %s180
    %p184 = scmp.eq.s32.totalorder %s15, 0
    %p185 = por %p183, %p184
    %p186 = scmp.ne.s32.totalorder %s178, %s180
    %p187 = scmp.eq.s32.totalorder %s20, 1
    %p188 = por %p186, %p187
    %p189 = scmp.ne.s32.totalorder %s180, %s181
    %p190 = scmp.eq.s32.totalorder %s20, 0
    %p191 = por %p189, %p190
    %p192 = scmp.ne.s32.totalorder %s180, %s181
    %p193 = scmp.eq.s32.totalorder %s21, 1
    %p194 = por %p192, %p193
    %p196 = scmp.ne.s32.totalorder %s181, %s195
    %p197 = scmp.eq.s32.totalorder %s21, 0
    %p198 = por %p196, %p197
    %s200 = sadd.s32 %s199, 1
    %p203 = scmp.eq.s32.totalorder %s15, 1
    %p204 = scmp.ne.s32.totalorder %s199, %s201
    %p205 = scmp.eq.s32.totalorder %s15, 0
    %p206 = por %p204, %p205
    %p207 = scmp.ne.s32.totalorder %s199, %s201
    %p208 = scmp.eq.s32.totalorder %s20, 1
    %p209 = por %p207, %p208
    %p210 = scmp.ne.s32.totalorder %s201, %s202
    %p211 = scmp.eq.s32.totalorder %s20, 0
    %p212 = por %p210, %p211
    %p213 = scmp.ne.s32.totalorder %s201, %s202
    %p214 = scmp.eq.s32.totalorder %s21, 1
    %p215 = por %p213, %p214
    %p217 = scmp.ne.s32.totalorder %s202, %s216
    %p218 = scmp.eq.s32.totalorder %s21, 0
    %p219 = por %p217, %p218
    %s221 = sadd.s32 %s220, 1
    %p224 = scmp.eq.s32.totalorder %s15, 1
    %p225 = scmp.ne.s32.totalorder %s220, %s222
    %p226 = scmp.eq.s32.totalorder %s15, 0
    %p227 = por %p225, %p226
    %p228 = scmp.ne.s32.totalorder %s220, %s222
    %p229 = scmp.eq.s32.totalorder %s20, 1
    %p230 = por %p228, %p229
    %p231 = scmp.ne.s32.totalorder %s222, %s223
    %p232 = scmp.eq.s32.totalorder %s20, 0
    %p233 = por %p231, %p232
    %p234 = scmp.ne.s32.totalorder %s222, %s223
    %p235 = scmp.eq.s32.totalorder %s21, 1
    %p236 = por %p234, %p235
    %p238 = scmp.ne.s32.totalorder %s223, %s237
    %p239 = scmp.eq.s32.totalorder %s21, 0
    %p240 = por %p238, %p239
    %s241 = ssub.s32 %s22, %s34
    %s242 = ssub.s32 %s23, %s30
    %s243 = sor.u32 %s241, %s242
    %p244 = scmp.eq.s32.totalorder %s243, 0
    %s246 = sadd.s32 %s245, 1
    %s247 = scalar_select %p244, %s245, %s246
    %p250 = pneg %p244
    %p251 = scmp.eq.s32.totalorder %s15, 1
    %p252 = por %p250, %p251
    %p253 = scmp.ne.s32.totalorder %s245, %s248
    %p254 = scmp.eq.s32.totalorder %s15, 0
    %p255 = por %p253, %p254
    %p256 = scmp.ne.s32.totalorder %s245, %s248
    %p257 = scmp.eq.s32.totalorder %s20, 1
    %p258 = por %p256, %p257
    %p259 = scmp.ne.s32.totalorder %s248, %s249
    %p260 = scmp.eq.s32.totalorder %s20, 0
    %p261 = por %p259, %p260
    %p262 = scmp.ne.s32.totalorder %s248, %s249
    %p263 = scmp.eq.s32.totalorder %s21, 1
    %p264 = por %p262, %p263
    %p266 = scmp.ne.s32.totalorder %s249, %s265
    %p267 = scmp.eq.s32.totalorder %s21, 0
    %p268 = por %p266, %p267
    %p269 = scmp.le.s32.totalorder 1, %s15
    %p270 = scmp.lt.s32.totalorder %s15, 3
    %p271 = pnand %p269, %p270
    %p272 = pneg %p271
    // Predicated region
    $region9: #{tpu_custom_call.1} parent=5 // pred_check
      _
    $region10: #{tpu_custom_call.1} parent=5 // pred_check_branch
      %274 = sbr.rel (%p271) target = $region12
    $region11: #{tpu_custom_call.1} parent=5 // pred_region
      %s275 = ssub.s32 %s15, 1
      // Predicated region
      $region13: #{tpu_custom_call.1} parent=11 // pred_check
        %p276 = pneg %p128
      $region14: #{tpu_custom_call.1} parent=11 // pred_check_branch
        %278 = sbr.rel (%p276) target = $region16
      $region15: #{tpu_custom_call.1} parent=11 // pred_region
        _
      $region16: #{tpu_custom_call.1} parent=11 // pred_fallthru
        _
      // Predicated region
      $region17: #{tpu_custom_call.1} parent=11 // pred_check
        %p279 = pneg %p149
      $region18: #{tpu_custom_call.1} parent=11 // pred_check_branch
        %281 = sbr.rel (%p279) target = $region20
      $region19: #{tpu_custom_call.1} parent=11 // pred_region
        _
      $region20: #{tpu_custom_call.1} parent=11 // pred_fallthru
        _
      // Predicated region
      $region21: #{tpu_custom_call.1} parent=11 // pred_check
        %p282 = pneg %p170
      $region22: #{tpu_custom_call.1} parent=11 // pred_check_branch
        %284 = sbr.rel (%p282) target = $region24
      $region23: #{tpu_custom_call.1} parent=11 // pred_region
        _
      $region24: #{tpu_custom_call.1} parent=11 // pred_fallthru
        _
      // Predicated region
      $region25: #{tpu_custom_call.1} parent=11 // pred_check
        %p285 = pneg %p191
      $region26: #{tpu_custom_call.1} parent=11 // pred_check_branch
        %287 = sbr.rel (%p285) target = $region28
      $region27: #{tpu_custom_call.1} parent=11 // pred_region
        _
      $region28: #{tpu_custom_call.1} parent=11 // pred_fallthru
        _
      // Predicated region
      $region29: #{tpu_custom_call.1} parent=11 // pred_check
        %p288 = pneg %p212
      $region30: #{tpu_custom_call.1} parent=11 // pred_check_branch
        %290 = sbr.rel (%p288) target = $region32
      $region31: #{tpu_custom_call.1} parent=11 // pred_region
        _
      $region32: #{tpu_custom_call.1} parent=11 // pred_fallthru
        _
      // Predicated region
      $region33: #{tpu_custom_call.1} parent=11 // pred_check
        %p291 = pneg %p233
      $region34: #{tpu_custom_call.1} parent=11 // pred_check_branch
        %293 = sbr.rel (%p291) target = $region36
      $region35: #{tpu_custom_call.1} parent=11 // pred_region
        _
      $region36: #{tpu_custom_call.1} parent=11 // pred_fallthru
        _
    $region12: #{tpu_custom_call.1} parent=5 // pred_fallthru
      _
    %p294 = scmp.lt.s32.totalorder %s15, 2
    // Predicated region
    $region37: #{tpu_custom_call.1} parent=5 // pred_check
      %p295 = pneg %p294
    $region38: #{tpu_custom_call.1} parent=5 // pred_check_branch
      %297 = sbr.rel (%p295) target = $region40
    $region39: #{tpu_custom_call.1} parent=5 // pred_region
      // Predicated region
      $region41: #{tpu_custom_call.1} parent=39 // pred_check
        %p298 = pneg %p49
      $region42: #{tpu_custom_call.1} parent=39 // pred_check_branch
        %300 = sbr.rel (%p298) target = $region44
      $region43: #{tpu_custom_call.1} parent=39 // pred_region
        %s301 = smul.u32 8, %s23
        %p302 = scmp.lt.s32.totalorder %s22, 1
        %s303 = scalar_select %p302, %s22, 1
        %p304 = scmp.lt.s32.totalorder %s301, 7
        %s305 = scalar_select %p304, %s301, 7
        %s306 = smul.addr %s303, 8
        %s307 = sadd.s32 %s305, %s306
        %s308 = smul.addr %s307, 4
        %s309 = scalar_lea.vmem %s0, %s308
        %s310 = smul.u32 8, %s23
      $region44: #{tpu_custom_call.1} parent=39 // pred_fallthru
        _
      // Predicated region
      $region45: #{tpu_custom_call.1} parent=39 // pred_check
        %p311 = pneg %p75
      $region46: #{tpu_custom_call.1} parent=39 // pred_check_branch
        %313 = sbr.rel (%p311) target = $region48
      $region47: #{tpu_custom_call.1} parent=39 // pred_region
        %p314 = scmp.lt.s32.totalorder %s22, 1
        %s315 = scalar_select %p314, %s22, 1
        %s316 = scalar_lea.vmem %s1, %s315
      $region48: #{tpu_custom_call.1} parent=39 // pred_fallthru
        _
      // Predicated region
      $region49: #{tpu_custom_call.1} parent=39 // pred_check
        %p317 = pneg %p101
      $region50: #{tpu_custom_call.1} parent=39 // pred_check_branch
        %319 = sbr.rel (%p317) target = $region52
      $region51: #{tpu_custom_call.1} parent=39 // pred_region
        %p320 = scmp.lt.s32.totalorder %s22, 1
        %s321 = scalar_select %p320, %s22, 1
        %s322 = scalar_lea.vmem %s2, %s321
      $region52: #{tpu_custom_call.1} parent=39 // pred_fallthru
        _
    $region40: #{tpu_custom_call.1} parent=5 // pred_fallthru
      _
    %p323 = scmp.le.s32.totalorder 1, %s15
    %p324 = scmp.lt.s32.totalorder %s15, 3
    %p325 = pnand %p323, %p324
    %p326 = pneg %p325
    // Predicated region
    $region53: #{tpu_custom_call.1} parent=5 // pred_check
      _
    $region54: #{tpu_custom_call.1} parent=5 // pred_check_branch
      %328 = sbr.rel (%p325) target = $region56
    $region55: #{tpu_custom_call.1} parent=5 // pred_region
      %s329 = ssub.s32 %s15, 1
      %s330 = smul.u32 8, %s25
      %p331 = scmp.lt.s32.totalorder %s24, 1
      %s332 = scalar_select %p331, %s24, 1
      %p333 = scmp.lt.s32.totalorder %s330, 7
      %s334 = scalar_select %p333, %s330, 7
      %s335 = smul.addr %s332, 8
      %s336 = sadd.s32 %s334, %s335
      %s337 = smul.addr %s336, 4
      %s338 = scalar_lea.vmem %s0, %s337
      %p339 = pneg %p55
      %p340 = pneg %p52
      %p341 = scmp.lt.s32.totalorder %s24, 1
      %s342 = scalar_select %p341, %s24, 1
      %s343 = scalar_lea.vmem %s1, %s342
      %p344 = pneg %p81
      %p345 = pneg %p78
      %p346 = scmp.lt.s32.totalorder %s24, 1
      %s347 = scalar_select %p346, %s24, 1
      %s348 = scalar_lea.vmem %s2, %s347
      %p349 = pneg %p107
      %p350 = pneg %p104
      %p351 = pneg %p128
      %p352 = pneg %p125
      %p353 = pneg %p149
      %p354 = pneg %p146
      %p355 = pneg %p170
      %p356 = pneg %p167
      %p357 = pneg %p191
      %p358 = pneg %p188
      %p359 = pneg %p212
      %p360 = pneg %p209
      %p361 = pneg %p233
      %p362 = pneg %p230
      %p363 = pneg %p261
      %p364 = pneg %p258
      %s365 = smul.u32 8, %s25
      %p366 = scmp.lt.s32.totalorder %s24, 1
      %s367 = scalar_select %p366, %s24, 1
      %p368 = scmp.lt.s32.totalorder %s365, 7
      %s369 = scalar_select %p368, %s365, 7
      %s370 = smul.addr %s367, 8
      %s371 = sadd.s32 %s369, %s370
      %s372 = smul.addr %s371, 8
      %s373 = scalar_lea.vmem %s9, %s372
      %s374 = smul.u32 8, %s25
      %p375 = scmp.lt.s32.totalorder %s24, 1
      %s376 = scalar_select %p375, %s24, 1
      %p377 = scmp.lt.s32.totalorder %s374, 7
      %s378 = scalar_select %p377, %s374, 7
      %s379 = smul.addr %s376, 8
      %s380 = sadd.s32 %s378, %s379
      %s381 = smul.addr %s380, 4
      %s382 = scalar_lea.vmem %s0, %s381
      %s383 = smul.u32 8, %s25
      %p384 = scmp.lt.s32.totalorder %s24, 1
      %s385 = scalar_select %p384, %s24, 1
      %s386 = scalar_lea.vmem %s1, %s385
      %p387 = scmp.lt.s32.totalorder %s24, 1
      %s388 = scalar_select %p387, %s24, 1
      %s389 = scalar_lea.vmem %s2, %s388
      %s390 = smul.u32 8, %s25
      %p391 = scmp.lt.s32.totalorder %s24, 1
      %s392 = scalar_select %p391, %s24, 1
      %p393 = scmp.lt.s32.totalorder %s390, 7
      %s394 = scalar_select %p393, %s390, 7
      %s395 = smul.addr %s392, 8
      %s396 = sadd.s32 %s394, %s395
      %s397 = smul.addr %s396, 8
      %s398 = scalar_lea.vmem %s9, %s397
      %s399 = smul.u32 8, %s25
      %v401 = vld [vmem:[%s382] sm:$0xf]
      %v402 = vld [vmem:[%s382 + $0x4] sm:$0xf]
      %v403 = vld [vmem:[%s382 + $0x8] sm:$0xf]
      %v404 = vld [vmem:[%s382 + $0xc] sm:$0xf]
      %v405 = vld [vmem:[%s382 + $0x10] sm:$0xf]
      %v406 = vld [vmem:[%s382 + $0x14] sm:$0xf]
      %v407 = vld [vmem:[%s382 + $0x18] sm:$0xf]
      %v408 = vld [vmem:[%s382 + $0x1c] sm:$0xf]
      %v409 = vld [vmem:[%s3] sm:$0x3]
      %v410 = vld [vmem:[%s4] sm:$0x1]
      %v412 = vlaneseq
      %v413 = vshrl.u32 %v412, 7
      %v414 = vsub.s32 0, %v413
      %v415 = vrot.slane %v410, %v414
      %v425 = vunpack.c.l.b16 %v401
      %v426 = vunpack.c.l.b16 %v402
      %v427 = vunpack.c.l.b16 %v403
      %v428 = vunpack.c.l.b16 %v404
      %v429 = vunpack.c.l.b16 %v405
      %v430 = vunpack.c.l.b16 %v406
      %v431 = vunpack.c.l.b16 %v407
      %v432 = vunpack.c.l.b16 %v408
      %v433 = vpack.c.b16 %v426, %v425
      %v434 = vpack.c.b16 %v428, %v427
      %v435 = vpack.c.b16 %v430, %v429
      %v436 = vpack.c.b16 %v432, %v431
      %vm437 = vcmask 23552
      %v439 = vsel %vm437, %v433, 0
      %v442 = vsel %vm437, %v434, 0
      %v445 = vsel %vm437, %v435, 0
      %v448 = vsel %vm437, %v436, 0
      %vm450 = vcmask 1040384
      %vm451 = vcmask 1041408
      %v452 = vsel %vm450, 4294967295, 65535
      %v453 = vsel %vm451, %v452, 0
      %v455 = vand.u32 %v409, %v453
      %457 = vmatprep.subr.bf16.mxu0 0
      %458 = vmatpush1.bf16.msra.mxu0 0
      %459 = vmatprep.subr.bf16.mxu0 0
      %460 = vmatpush1.bf16.msra.mxu0 0
      %461 = vmatprep.subr.bf16.mxu0 0
      %462 = vmatpush1.bf16.msra.mxu0 0
      %463 = vmatprep.subr.bf16.mxu0 0
      %464 = vmatpush1.bf16.msra.mxu0 0
      %465 = vmatprep.subr.bf16.mxu0 0
      %466 = vmatpush1.bf16.msra.mxu0 0
      %467 = vmatprep.subr.bf16.mxu0 0
      %468 = vmatpush1.bf16.msra.mxu0 0
      %469 = vmatprep.subr.bf16.mxu0 0
      %470 = vmatpush1.bf16.msra.mxu0 0
      %471 = vmatprep.subr.bf16.mxu0 0
      %472 = vmatpush1.bf16.msra.mxu0 %v455
      %473 = vmatprep.subr.bf16.mxu0 0
      %474 = vmatpush2.bf16.msra.mxu0 0
      %475 = vmatprep.subr.bf16.mxu0 0
      %476 = vmatpush2.bf16.msra.mxu0 0
      %477 = vmatprep.subr.bf16.mxu0 0
      %478 = vmatpush2.bf16.msra.mxu0 0
      %479 = vmatprep.subr.bf16.mxu0 0
      %480 = vmatpush2.bf16.msra.mxu0 0
      %481 = vmatprep.subr.bf16.mxu0 0
      %482 = vmatpush2.bf16.msra.mxu0 0
      %483 = vmatprep.subr.bf16.mxu0 0
      %484 = vmatpush2.bf16.msra.mxu0 0
      %485 = vmatprep.subr.bf16.mxu0 0
      %486 = vmatpush2.bf16.msra.mxu0 0
      %487 = vmatprep.subr.bf16.mxu0 0
      %488 = vmatpush2.bf16.msra.mxu0 0
      %489 = vmatprep.mubr.bf16.mxu0 0
      %490 = vmatmul.mubr.bf16.gmra.mxu0 %v439
      %v491 = vpop.f32.mrf.mxu0
      %v492 = vadd.f32 %v415, %v491
      %v493 = vpop.f32.mrf.mxu0
      %v494 = vpop.f32.mrf.mxu0
      %v495 = vadd.f32 %v415, %v494
      %v496 = vpop.f32.mrf.mxu0
      %497 = vmatprep.mubr.bf16.mxu0 0
      %498 = vmatmul.mubr.bf16.gmra.mxu0 %v442
      %v499 = vpop.f32.mrf.mxu0
      %v500 = vadd.f32 %v415, %v499
      %v501 = vpop.f32.mrf.mxu0
      %v502 = vpop.f32.mrf.mxu0
      %v503 = vadd.f32 %v415, %v502
      %v504 = vpop.f32.mrf.mxu0
      %505 = vmatprep.mubr.bf16.mxu0 0
      %506 = vmatmul.mubr.bf16.gmra.mxu0 %v445
      %v507 = vpop.f32.mrf.mxu0
      %v508 = vadd.f32 %v415, %v507
      %v509 = vpop.f32.mrf.mxu0
      %v510 = vpop.f32.mrf.mxu0
      %v511 = vadd.f32 %v415, %v510
      %v512 = vpop.f32.mrf.mxu0
      %513 = vmatprep.mubr.bf16.mxu0 0
      %514 = vmatmul.mubr.bf16.gmra.mxu0 %v448
      %v515 = vpop.f32.mrf.mxu0
      %v516 = vadd.f32 %v415, %v515
      %v517 = vpop.f32.mrf.mxu0
      %v518 = vpop.f32.mrf.mxu0
      %v519 = vadd.f32 %v415, %v518
      %v520 = vpop.f32.mrf.mxu0
      %521 = vdwg.mxu0
      %vm522 = vcmask 261120
      %v523 = vsel %vm522, %v492, 0.0
      %524 = vadd.xlane.f32.xlu0 %v523
      %v525 = vpop.xlane.xlu0 %524
      %v526 = vsel %vm522, %v495, 0.0
      %527 = vadd.xlane.f32.xlu0 %v526
      %v528 = vpop.xlane.xlu0 %527
      %v529 = vsel %vm522, %v500, 0.0
      %530 = vadd.xlane.f32.xlu0 %v529
      %v531 = vpop.xlane.xlu0 %530
      %v532 = vsel %vm522, %v503, 0.0
      %533 = vadd.xlane.f32.xlu0 %v532
      %v534 = vpop.xlane.xlu0 %533
      %v535 = vsel %vm522, %v508, 0.0
      %536 = vadd.xlane.f32.xlu0 %v535
      %v537 = vpop.xlane.xlu0 %536
      %v538 = vsel %vm522, %v511, 0.0
      %539 = vadd.xlane.f32.xlu0 %v538
      %v540 = vpop.xlane.xlu0 %539
      %v541 = vsel %vm522, %v516, 0.0
      %542 = vadd.xlane.f32.xlu0 %v541
      %v543 = vpop.xlane.xlu0 %542
      %v544 = vsel %vm522, %v519, 0.0
      %545 = vadd.xlane.f32.xlu0 %v544
      %v546 = vpop.xlane.xlu0 %545
      %v547 = vrcp.pop 32.0
      %v548 = vmul.f32 %v525, %v547
      %v549 = vmul.f32 %v528, %v547
      %v550 = vmul.f32 %v531, %v547
      %v551 = vmul.f32 %v534, %v547
      %v552 = vmul.f32 %v537, %v547
      %v553 = vmul.f32 %v540, %v547
      %v554 = vmul.f32 %v543, %v547
      %v555 = vmul.f32 %v546, %v547
      %v556 = vsub.f32 %v492, %v548
      %v557 = vsub.f32 %v495, %v549
      %v558 = vsub.f32 %v500, %v550
      %v559 = vsub.f32 %v503, %v551
      %v560 = vsub.f32 %v508, %v552
      %v561 = vsub.f32 %v511, %v553
      %v562 = vsub.f32 %v516, %v554
      %v563 = vsub.f32 %v519, %v555
      %v564 = vmul.f32 %v556, %v556
      %v565 = vmul.f32 %v557, %v557
      %v566 = vmul.f32 %v558, %v558
      %v567 = vmul.f32 %v559, %v559
      %v568 = vmul.f32 %v560, %v560
      %v569 = vmul.f32 %v561, %v561
      %v570 = vmul.f32 %v562, %v562
      %v571 = vmul.f32 %v563, %v563
      %v572 = vsel %vm522, %v564, 0.0
      %573 = vadd.xlane.f32.xlu0 %v572
      %v574 = vpop.xlane.xlu0 %573
      %v575 = vsel %vm522, %v565, 0.0
      %576 = vadd.xlane.f32.xlu0 %v575
      %v577 = vpop.xlane.xlu0 %576
      %v578 = vsel %vm522, %v566, 0.0
      %579 = vadd.xlane.f32.xlu0 %v578
      %v580 = vpop.xlane.xlu0 %579
      %v581 = vsel %vm522, %v567, 0.0
      %582 = vadd.xlane.f32.xlu0 %v581
      %v583 = vpop.xlane.xlu0 %582
      %v584 = vsel %vm522, %v568, 0.0
      %585 = vadd.xlane.f32.xlu0 %v584
      %v586 = vpop.xlane.xlu0 %585
      %v587 = vsel %vm522, %v569, 0.0
      %588 = vadd.xlane.f32.xlu0 %v587
      %v589 = vpop.xlane.xlu0 %588
      %v590 = vsel %vm522, %v570, 0.0
      %591 = vadd.xlane.f32.xlu0 %v590
      %v592 = vpop.xlane.xlu0 %591
      %v593 = vsel %vm522, %v571, 0.0
      %594 = vadd.xlane.f32.xlu0 %v593
      %v595 = vpop.xlane.xlu0 %594
      %v596 = vmul.f32 %v574, %v547
      %v597 = vmul.f32 %v577, %v547
      %v598 = vmul.f32 %v580, %v547
      %v599 = vmul.f32 %v583, %v547
      %v600 = vmul.f32 %v586, %v547
      %v601 = vmul.f32 %v589, %v547
      %v602 = vmul.f32 %v592, %v547
      %v603 = vmul.f32 %v595, %v547
      %v604 = vadd.f32 %v596, 1e-05
      %v605 = vadd.f32 %v597, 1e-05
      %v606 = vadd.f32 %v598, 1e-05
      %v607 = vadd.f32 %v599, 1e-05
      %v608 = vadd.f32 %v600, 1e-05
      %v609 = vadd.f32 %v601, 1e-05
      %v610 = vadd.f32 %v602, 1e-05
      %v611 = vadd.f32 %v603, 1e-05
      %v612 = vrsqrt.pop %v604
      %v613 = vrsqrt.pop %v605
      %v614 = vrsqrt.pop %v606
      %v615 = vrsqrt.pop %v607
      %v616 = vrsqrt.pop %v608
      %v617 = vrsqrt.pop %v609
      %v618 = vrsqrt.pop %v610
      %v619 = vrsqrt.pop %v611
      %v620 = vmul.f32 %v556, %v612
      %v621 = vmul.f32 %v557, %v613
      %v622 = vmul.f32 %v558, %v614
      %v623 = vmul.f32 %v559, %v615
      %v624 = vmul.f32 %v560, %v616
      %v625 = vmul.f32 %v561, %v617
      %v626 = vmul.f32 %v562, %v618
      %v627 = vmul.f32 %v563, %v619
      %v628 = vld [vmem:[%s386] sm:$0x1]
      %v630 = vlaneseq
      %v631 = vshrl.u32 %v630, 7
      %v632 = vsub.s32 0, %v631
      %v633 = vrot.slane %v628, %v632
      %v635 = vmul.f32 %v620, %v633
      %v636 = vmul.f32 %v621, %v633
      %v637 = vmul.f32 %v622, %v633
      %v638 = vmul.f32 %v623, %v633
      %v639 = vmul.f32 %v624, %v633
      %v640 = vmul.f32 %v625, %v633
      %v641 = vmul.f32 %v626, %v633
      %v642 = vmul.f32 %v627, %v633
      %v643 = vld [vmem:[%s389] sm:$0x1]
      %v645 = vlaneseq
      %v646 = vshrl.u32 %v645, 7
      %v647 = vsub.s32 0, %v646
      %v648 = vrot.slane %v643, %v647
      %v650 = vadd.f32 %v635, %v648
      %v651 = vadd.f32 %v636, %v648
      %v652 = vadd.f32 %v637, %v648
      %v653 = vadd.f32 %v638, %v648
      %v654 = vadd.f32 %v639, %v648
      %v655 = vadd.f32 %v640, %v648
      %v656 = vadd.f32 %v641, %v648
      %v657 = vadd.f32 %v642, %v648
      %vm658 = vcmp.gt.f32.partialorder %v650, 0.0
      %vm659 = vcmp.gt.f32.partialorder %v651, 0.0
      %vm660 = vcmp.gt.f32.partialorder %v652, 0.0
      %vm661 = vcmp.gt.f32.partialorder %v653, 0.0
      %vm662 = vcmp.gt.f32.partialorder %v654, 0.0
      %vm663 = vcmp.gt.f32.partialorder %v655, 0.0
      %vm664 = vcmp.gt.f32.partialorder %v656, 0.0
      %vm665 = vcmp.gt.f32.partialorder %v657, 0.0
      %v666 = vmul.f32 %v650, 0.2
      %v667 = vmul.f32 %v651, 0.2
      %v668 = vmul.f32 %v652, 0.2
      %v669 = vmul.f32 %v653, 0.2
      %v670 = vmul.f32 %v654, 0.2
      %v671 = vmul.f32 %v655, 0.2
      %v672 = vmul.f32 %v656, 0.2
      %v673 = vmul.f32 %v657, 0.2
      %v674 = vsel %vm658, %v650, %v666
      %v675 = vsel %vm659, %v651, %v667
      %v676 = vsel %vm660, %v652, %v668
      %v677 = vsel %vm661, %v653, %v669
      %v678 = vsel %vm662, %v654, %v670
      %v679 = vsel %vm663, %v655, %v671
      %v680 = vsel %vm664, %v656, %v672
      %v681 = vsel %vm665, %v657, %v673
      %v682 = vpack.c.bf16 %v675, %v674
      %v683 = vpack.c.bf16 %v677, %v676
      %v684 = vpack.c.bf16 %v679, %v678
      %v685 = vpack.c.bf16 %v681, %v680
      %v686 = vld [vmem:[%s5] sm:$0xf]
      %v687 = vld [vmem:[%s5 + $0x4] sm:$0xf]
      %v688 = vld [vmem:[%s5 + $0x8] sm:$0xf]
      %v689 = vld [vmem:[%s5 + $0xc] sm:$0xf]
      %v690 = vld [vmem:[%s6] sm:$0x1]
      %v692 = vlaneseq
      %v693 = vshrl.u32 %v692, 7
      %v694 = vsub.s32 0, %v693
      %v695 = vrot.slane %v690, %v694
      %v701 = vunpack.c.l.b16 %v686
      %v702 = vunpack.c.l.b16 %v687
      %v703 = vunpack.c.l.b16 %v688
      %v704 = vunpack.c.l.b16 %v689
      %v705 = vpack.c.b16 %v702, %v701
      %v706 = vpack.c.b16 %v704, %v703
      %v710 = vsel %vm522, %v682, 0
      %v713 = vsel %vm522, %v683, 0
      %v716 = vsel %vm522, %v684, 0
      %v719 = vsel %vm522, %v685, 0
      %721 = vmatprep.subr.bf16.mxu0 0
      %722 = vmatpush1.bf16.msra.mxu0 0
      %723 = vmatprep.subr.bf16.mxu0 0
      %724 = vmatpush1.bf16.msra.mxu0 0
      %725 = vmatprep.subr.bf16.mxu0 0
      %726 = vmatpush1.bf16.msra.mxu0 0
      %727 = vmatprep.subr.bf16.mxu0 0
      %728 = vmatpush1.bf16.msra.mxu0 0
      %729 = vmatprep.subr.bf16.mxu0 0
      %730 = vmatpush1.bf16.msra.mxu0 0
      %731 = vmatprep.subr.bf16.mxu0 0
      %732 = vmatpush1.bf16.msra.mxu0 0
      %733 = vmatprep.subr.bf16.mxu0 0
      %734 = vmatpush1.bf16.msra.mxu0 %v706
      %735 = vmatprep.subr.bf16.mxu0 0
      %736 = vmatpush1.bf16.msra.mxu0 %v705
      %737 = vmatprep.subr.bf16.mxu0 0
      %738 = vmatpush2.bf16.msra.mxu0 0
      %739 = vmatprep.subr.bf16.mxu0 0
      %740 = vmatpush2.bf16.msra.mxu0 0
      %741 = vmatprep.subr.bf16.mxu0 0
      %742 = vmatpush2.bf16.msra.mxu0 0
      %743 = vmatprep.subr.bf16.mxu0 0
      %744 = vmatpush2.bf16.msra.mxu0 0
      %745 = vmatprep.subr.bf16.mxu0 0
      %746 = vmatpush2.bf16.msra.mxu0 0
      %747 = vmatprep.subr.bf16.mxu0 0
      %748 = vmatpush2.bf16.msra.mxu0 0
      %749 = vmatprep.subr.bf16.mxu0 0
      %750 = vmatpush2.bf16.msra.mxu0 0
      %751 = vmatprep.subr.bf16.mxu0 0
      %752 = vmatpush2.bf16.msra.mxu0 0
      %753 = vmatprep.mubr.bf16.mxu0 0
      %754 = vmatmul.mubr.bf16.gmra.mxu0 %v710
      %v755 = vpop.f32.mrf.mxu0
      %v756 = vadd.f32 %v695, %v755
      %v757 = vpop.f32.mrf.mxu0
      %v758 = vpop.f32.mrf.mxu0
      %v759 = vadd.f32 %v695, %v758
      %v760 = vpop.f32.mrf.mxu0
      %761 = vmatprep.mubr.bf16.mxu0 0
      %762 = vmatmul.mubr.bf16.gmra.mxu0 %v713
      %v763 = vpop.f32.mrf.mxu0
      %v764 = vadd.f32 %v695, %v763
      %v765 = vpop.f32.mrf.mxu0
      %v766 = vpop.f32.mrf.mxu0
      %v767 = vadd.f32 %v695, %v766
      %v768 = vpop.f32.mrf.mxu0
      %769 = vmatprep.mubr.bf16.mxu0 0
      %770 = vmatmul.mubr.bf16.gmra.mxu0 %v716
      %v771 = vpop.f32.mrf.mxu0
      %v772 = vadd.f32 %v695, %v771
      %v773 = vpop.f32.mrf.mxu0
      %v774 = vpop.f32.mrf.mxu0
      %v775 = vadd.f32 %v695, %v774
      %v776 = vpop.f32.mrf.mxu0
      %777 = vmatprep.mubr.bf16.mxu0 0
      %778 = vmatmul.mubr.bf16.gmra.mxu0 %v719
      %v779 = vpop.f32.mrf.mxu0
      %v780 = vadd.f32 %v695, %v779
      %v781 = vpop.f32.mrf.mxu0
      %v782 = vpop.f32.mrf.mxu0
      %v783 = vadd.f32 %v695, %v782
      %v784 = vpop.f32.mrf.mxu0
      %785 = vdwg.mxu0
      %vm786 = vcmp.gt.f32.partialorder %v756, 0.0
      %vm787 = vcmp.gt.f32.partialorder %v759, 0.0
      %vm788 = vcmp.gt.f32.partialorder %v764, 0.0
      %vm789 = vcmp.gt.f32.partialorder %v767, 0.0
      %vm790 = vcmp.gt.f32.partialorder %v772, 0.0
      %vm791 = vcmp.gt.f32.partialorder %v775, 0.0
      %vm792 = vcmp.gt.f32.partialorder %v780, 0.0
      %vm793 = vcmp.gt.f32.partialorder %v783, 0.0
      %v794 = vmul.f32 %v756, 0.2
      %v795 = vmul.f32 %v759, 0.2
      %v796 = vmul.f32 %v764, 0.2
      %v797 = vmul.f32 %v767, 0.2
      %v798 = vmul.f32 %v772, 0.2
      %v799 = vmul.f32 %v775, 0.2
      %v800 = vmul.f32 %v780, 0.2
      %v801 = vmul.f32 %v783, 0.2
      %v802 = vsel %vm786, %v756, %v794
      %v803 = vsel %vm787, %v759, %v795
      %v804 = vsel %vm788, %v764, %v796
      %v805 = vsel %vm789, %v767, %v797
      %v806 = vsel %vm790, %v772, %v798
      %v807 = vsel %vm791, %v775, %v799
      %v808 = vsel %vm792, %v780, %v800
      %v809 = vsel %vm793, %v783, %v801
      %v810 = vpack.c.bf16 %v803, %v802
      %v811 = vpack.c.bf16 %v805, %v804
      %v812 = vpack.c.bf16 %v807, %v806
      %v813 = vpack.c.bf16 %v809, %v808
      %v814 = vld [vmem:[%s7] sm:$0xf]
      %v815 = vld [vmem:[%s7 + $0x4] sm:$0xf]
      %v816 = vld [vmem:[%s7 + $0x8] sm:$0xf]
      %v817 = vld [vmem:[%s7 + $0xc] sm:$0xf]
      %s818 = scalar_lea.vmem %s5, 16
      %v819 = vld [vmem:[%s818] sm:$0xf]
      %v820 = vld [vmem:[%s818 + $0x4] sm:$0xf]
      %v821 = vld [vmem:[%s818 + $0x8] sm:$0xf]
      %v822 = vld [vmem:[%s818 + $0xc] sm:$0xf]
      %s823 = scalar_lea.vmem %s6, 1
      %v824 = vld [vmem:[%s823] sm:$0x1]
      %v826 = vlaneseq
      %v827 = vshrl.u32 %v826, 7
      %v828 = vsub.s32 0, %v827
      %v829 = vrot.slane %v824, %v828
      %v835 = vunpack.c.l.b16 %v819
      %v836 = vunpack.c.l.b16 %v820
      %v837 = vunpack.c.l.b16 %v821
      %v838 = vunpack.c.l.b16 %v822
      %v839 = vpack.c.b16 %v836, %v835
      %v840 = vpack.c.b16 %v838, %v837
      %v844 = vsel %vm522, %v810, 0
      %v847 = vsel %vm522, %v811, 0
      %v850 = vsel %vm522, %v812, 0
      %v853 = vsel %vm522, %v813, 0
      %855 = vmatprep.subr.bf16.mxu0 0
      %856 = vmatpush1.bf16.msra.mxu0 0
      %857 = vmatprep.subr.bf16.mxu0 0
      %858 = vmatpush1.bf16.msra.mxu0 0
      %859 = vmatprep.subr.bf16.mxu0 0
      %860 = vmatpush1.bf16.msra.mxu0 0
      %861 = vmatprep.subr.bf16.mxu0 0
      %862 = vmatpush1.bf16.msra.mxu0 0
      %863 = vmatprep.subr.bf16.mxu0 0
      %864 = vmatpush1.bf16.msra.mxu0 0
      %865 = vmatprep.subr.bf16.mxu0 0
      %866 = vmatpush1.bf16.msra.mxu0 0
      %867 = vmatprep.subr.bf16.mxu0 0
      %868 = vmatpush1.bf16.msra.mxu0 %v840
      %869 = vmatprep.subr.bf16.mxu0 0
      %870 = vmatpush1.bf16.msra.mxu0 %v839
      %871 = vmatprep.subr.bf16.mxu0 0
      %872 = vmatpush2.bf16.msra.mxu0 0
      %873 = vmatprep.subr.bf16.mxu0 0
      %874 = vmatpush2.bf16.msra.mxu0 0
      %875 = vmatprep.subr.bf16.mxu0 0
      %876 = vmatpush2.bf16.msra.mxu0 0
      %877 = vmatprep.subr.bf16.mxu0 0
      %878 = vmatpush2.bf16.msra.mxu0 0
      %879 = vmatprep.subr.bf16.mxu0 0
      %880 = vmatpush2.bf16.msra.mxu0 0
      %881 = vmatprep.subr.bf16.mxu0 0
      %882 = vmatpush2.bf16.msra.mxu0 0
      %883 = vmatprep.subr.bf16.mxu0 0
      %884 = vmatpush2.bf16.msra.mxu0 0
      %885 = vmatprep.subr.bf16.mxu0 0
      %886 = vmatpush2.bf16.msra.mxu0 0
      %887 = vmatprep.mubr.bf16.mxu0 0
      %888 = vmatmul.mubr.bf16.gmra.mxu0 %v844
      %v889 = vpop.f32.mrf.mxu0
      %v890 = vadd.f32 %v829, %v889
      %v891 = vpop.f32.mrf.mxu0
      %v892 = vpop.f32.mrf.mxu0
      %v893 = vadd.f32 %v829, %v892
      %v894 = vpop.f32.mrf.mxu0
      %895 = vmatprep.mubr.bf16.mxu0 0
      %896 = vmatmul.mubr.bf16.gmra.mxu0 %v847
      %v897 = vpop.f32.mrf.mxu0
      %v898 = vadd.f32 %v829, %v897
      %v899 = vpop.f32.mrf.mxu0
      %v900 = vpop.f32.mrf.mxu0
      %v901 = vadd.f32 %v829, %v900
      %v902 = vpop.f32.mrf.mxu0
      %903 = vmatprep.mubr.bf16.mxu0 0
      %904 = vmatmul.mubr.bf16.gmra.mxu0 %v850
      %v905 = vpop.f32.mrf.mxu0
      %v906 = vadd.f32 %v829, %v905
      %v907 = vpop.f32.mrf.mxu0
      %v908 = vpop.f32.mrf.mxu0
      %v909 = vadd.f32 %v829, %v908
      %v910 = vpop.f32.mrf.mxu0
      %911 = vmatprep.mubr.bf16.mxu0 0
      %912 = vmatmul.mubr.bf16.gmra.mxu0 %v853
      %v913 = vpop.f32.mrf.mxu0
      %v914 = vadd.f32 %v829, %v913
      %v915 = vpop.f32.mrf.mxu0
      %v916 = vpop.f32.mrf.mxu0
      %v917 = vadd.f32 %v829, %v916
      %v918 = vpop.f32.mrf.mxu0
      %919 = vdwg.mxu0
      %vm920 = vcmp.gt.f32.partialorder %v890, 0.0
      %vm921 = vcmp.gt.f32.partialorder %v893, 0.0
      %vm922 = vcmp.gt.f32.partialorder %v898, 0.0
      %vm923 = vcmp.gt.f32.partialorder %v901, 0.0
      %vm924 = vcmp.gt.f32.partialorder %v906, 0.0
      %vm925 = vcmp.gt.f32.partialorder %v909, 0.0
      %vm926 = vcmp.gt.f32.partialorder %v914, 0.0
      %vm927 = vcmp.gt.f32.partialorder %v917, 0.0
      %v928 = vmul.f32 %v890, 0.2
      %v929 = vmul.f32 %v893, 0.2
      %v930 = vmul.f32 %v898, 0.2
      %v931 = vmul.f32 %v901, 0.2
      %v932 = vmul.f32 %v906, 0.2
      %v933 = vmul.f32 %v909, 0.2
      %v934 = vmul.f32 %v914, 0.2
      %v935 = vmul.f32 %v917, 0.2
      %v936 = vsel %vm920, %v890, %v928
      %v937 = vsel %vm921, %v893, %v929
      %v938 = vsel %vm922, %v898, %v930
      %v939 = vsel %vm923, %v901, %v931
      %v940 = vsel %vm924, %v906, %v932
      %v941 = vsel %vm925, %v909, %v933
      %v942 = vsel %vm926, %v914, %v934
      %v943 = vsel %vm927, %v917, %v935
      %v944 = vpack.c.bf16 %v937, %v936
      %v945 = vpack.c.bf16 %v939, %v938
      %v946 = vpack.c.bf16 %v941, %v940
      %v947 = vpack.c.bf16 %v943, %v942
      %s948 = scalar_lea.vmem %s7, 16
      %v949 = vld [vmem:[%s948] sm:$0xf]
      %v950 = vld [vmem:[%s948 + $0x4] sm:$0xf]
      %v951 = vld [vmem:[%s948 + $0x8] sm:$0xf]
      %v952 = vld [vmem:[%s948 + $0xc] sm:$0xf]
      %v957 = vunpack.c.l.b16 %v949
      %v958 = vunpack.c.l.b16 %v950
      %v959 = vunpack.c.l.b16 %v951
      %v960 = vunpack.c.l.b16 %v952
      %v961 = vpack.c.b16 %v958, %v957
      %v962 = vpack.c.b16 %v960, %v959
      %v966 = vsel %vm522, %v944, 0
      %v969 = vsel %vm522, %v945, 0
      %v972 = vsel %vm522, %v946, 0
      %v975 = vsel %vm522, %v947, 0
      %977 = vmatprep.subr.bf16.mxu0 0
      %978 = vmatpush1.bf16.msra.mxu0 0
      %979 = vmatprep.subr.bf16.mxu0 0
      %980 = vmatpush1.bf16.msra.mxu0 0
      %981 = vmatprep.subr.bf16.mxu0 0
      %982 = vmatpush1.bf16.msra.mxu0 0
      %983 = vmatprep.subr.bf16.mxu0 0
      %984 = vmatpush1.bf16.msra.mxu0 0
      %985 = vmatprep.subr.bf16.mxu0 0
      %986 = vmatpush1.bf16.msra.mxu0 0
      %987 = vmatprep.subr.bf16.mxu0 0
      %988 = vmatpush1.bf16.msra.mxu0 0
      %989 = vmatprep.subr.bf16.mxu0 0
      %990 = vmatpush1.bf16.msra.mxu0 %v962
      %991 = vmatprep.subr.bf16.mxu0 0
      %992 = vmatpush1.bf16.msra.mxu0 %v961
      %993 = vmatprep.subr.bf16.mxu0 0
      %994 = vmatpush2.bf16.msra.mxu0 0
      %995 = vmatprep.subr.bf16.mxu0 0
      %996 = vmatpush2.bf16.msra.mxu0 0
      %997 = vmatprep.subr.bf16.mxu0 0
      %998 = vmatpush2.bf16.msra.mxu0 0
      %999 = vmatprep.subr.bf16.mxu0 0
      %1000 = vmatpush2.bf16.msra.mxu0 0
      %1001 = vmatprep.subr.bf16.mxu0 0
      %1002 = vmatpush2.bf16.msra.mxu0 0
      %1003 = vmatprep.subr.bf16.mxu0 0
      %1004 = vmatpush2.bf16.msra.mxu0 0
      %1005 = vmatprep.subr.bf16.mxu0 0
      %1006 = vmatpush2.bf16.msra.mxu0 0
      %1007 = vmatprep.subr.bf16.mxu0 0
      %1008 = vmatpush2.bf16.msra.mxu0 0
      %1009 = vmatprep.mubr.bf16.mxu0 0
      %1010 = vmatmul.mubr.bf16.gmra.mxu0 %v966
      %v1011 = vpop.f32.mrf.mxu0
      %v1012 = vadd.f32 0.0, %v1011
      %v1013 = vpop.f32.mrf.mxu0
      %v1014 = vpop.f32.mrf.mxu0
      %v1015 = vadd.f32 0.0, %v1014
      %v1016 = vpop.f32.mrf.mxu0
      %1017 = vmatprep.mubr.bf16.mxu0 0
      %1018 = vmatmul.mubr.bf16.gmra.mxu0 %v969
      %v1019 = vpop.f32.mrf.mxu0
      %v1020 = vadd.f32 0.0, %v1019
      %v1021 = vpop.f32.mrf.mxu0
      %v1022 = vpop.f32.mrf.mxu0
      %v1023 = vadd.f32 0.0, %v1022
      %v1024 = vpop.f32.mrf.mxu0
      %1025 = vmatprep.mubr.bf16.mxu0 0
      %1026 = vmatmul.mubr.bf16.gmra.mxu0 %v972
      %v1027 = vpop.f32.mrf.mxu0
      %v1028 = vadd.f32 0.0, %v1027
      %v1029 = vpop.f32.mrf.mxu0
      %v1030 = vpop.f32.mrf.mxu0
      %v1031 = vadd.f32 0.0, %v1030
      %v1032 = vpop.f32.mrf.mxu0
      %1033 = vmatprep.mubr.bf16.mxu0 0
      %1034 = vmatmul.mubr.bf16.gmra.mxu0 %v975
      %v1035 = vpop.f32.mrf.mxu0
      %v1036 = vadd.f32 0.0, %v1035
      %v1037 = vpop.f32.mrf.mxu0
      %v1038 = vpop.f32.mrf.mxu0
      %v1039 = vadd.f32 0.0, %v1038
      %v1040 = vpop.f32.mrf.mxu0
      %1041 = vdwg.mxu0
      %v1046 = vunpack.c.l.b16 %v814
      %v1047 = vunpack.c.l.b16 %v815
      %v1048 = vunpack.c.l.b16 %v816
      %v1049 = vunpack.c.l.b16 %v817
      %v1050 = vpack.c.b16 %v1047, %v1046
      %v1051 = vpack.c.b16 %v1049, %v1048
      %1054 = vmatprep.subr.bf16.mxu0 0
      %1055 = vmatpush1.bf16.msra.mxu0 0
      %1056 = vmatprep.subr.bf16.mxu0 0
      %1057 = vmatpush1.bf16.msra.mxu0 0
      %1058 = vmatprep.subr.bf16.mxu0 0
      %1059 = vmatpush1.bf16.msra.mxu0 0
      %1060 = vmatprep.subr.bf16.mxu0 0
      %1061 = vmatpush1.bf16.msra.mxu0 0
      %1062 = vmatprep.subr.bf16.mxu0 0
      %1063 = vmatpush1.bf16.msra.mxu0 0
      %1064 = vmatprep.subr.bf16.mxu0 0
      %1065 = vmatpush1.bf16.msra.mxu0 0
      %1066 = vmatprep.subr.bf16.mxu0 0
      %1067 = vmatpush1.bf16.msra.mxu0 %v1051
      %1068 = vmatprep.subr.bf16.mxu0 0
      %1069 = vmatpush1.bf16.msra.mxu0 %v1050
      %1070 = vmatprep.subr.bf16.mxu0 0
      %1071 = vmatpush2.bf16.msra.mxu0 0
      %1072 = vmatprep.subr.bf16.mxu0 0
      %1073 = vmatpush2.bf16.msra.mxu0 0
      %1074 = vmatprep.subr.bf16.mxu0 0
      %1075 = vmatpush2.bf16.msra.mxu0 0
      %1076 = vmatprep.subr.bf16.mxu0 0
      %1077 = vmatpush2.bf16.msra.mxu0 0
      %1078 = vmatprep.subr.bf16.mxu0 0
      %1079 = vmatpush2.bf16.msra.mxu0 0
      %1080 = vmatprep.subr.bf16.mxu0 0
      %1081 = vmatpush2.bf16.msra.mxu0 0
      %1082 = vmatprep.subr.bf16.mxu0 0
      %1083 = vmatpush2.bf16.msra.mxu0 0
      %1084 = vmatprep.subr.bf16.mxu0 0
      %1085 = vmatpush2.bf16.msra.mxu0 0
      %1086 = vmatprep.mubr.bf16.mxu0 0
      %1087 = vmatmul.mubr.bf16.gmra.mxu0 %v844
      %v1088 = vpop.f32.mrf.mxu0
      %v1089 = vadd.f32 %v1012, %v1088
      %v1090 = vpop.f32.mrf.mxu0
      %v1091 = vpop.f32.mrf.mxu0
      %v1092 = vadd.f32 %v1015, %v1091
      %v1093 = vpop.f32.mrf.mxu0
      %1094 = vmatprep.mubr.bf16.mxu0 0
      %1095 = vmatmul.mubr.bf16.gmra.mxu0 %v847
      %v1096 = vpop.f32.mrf.mxu0
      %v1097 = vadd.f32 %v1020, %v1096
      %v1098 = vpop.f32.mrf.mxu0
      %v1099 = vpop.f32.mrf.mxu0
      %v1100 = vadd.f32 %v1023, %v1099
      %v1101 = vpop.f32.mrf.mxu0
      %1102 = vmatprep.mubr.bf16.mxu0 0
      %1103 = vmatmul.mubr.bf16.gmra.mxu0 %v850
      %v1104 = vpop.f32.mrf.mxu0
      %v1105 = vadd.f32 %v1028, %v1104
      %v1106 = vpop.f32.mrf.mxu0
      %v1107 = vpop.f32.mrf.mxu0
      %v1108 = vadd.f32 %v1031, %v1107
      %v1109 = vpop.f32.mrf.mxu0
      %1110 = vmatprep.mubr.bf16.mxu0 0
      %1111 = vmatmul.mubr.bf16.gmra.mxu0 %v853
      %v1112 = vpop.f32.mrf.mxu0
      %v1113 = vadd.f32 %v1036, %v1112
      %v1114 = vpop.f32.mrf.mxu0
      %v1115 = vpop.f32.mrf.mxu0
      %v1116 = vadd.f32 %v1039, %v1115
      %v1117 = vpop.f32.mrf.mxu0
      %1118 = vdwg.mxu0
      %v1119 = vld [vmem:[%s8] sm:$0x1]
      %v1121 = vlaneseq
      %v1122 = vshrl.u32 %v1121, 7
      %v1123 = vsub.s32 0, %v1122
      %v1124 = vrot.slane %v1119, %v1123
      %v1126 = vadd.f32 %v1089, %v1124
      %v1127 = vadd.f32 %v1092, %v1124
      %v1128 = vadd.f32 %v1097, %v1124
      %v1129 = vadd.f32 %v1100, %v1124
      %v1130 = vadd.f32 %v1105, %v1124
      %v1131 = vadd.f32 %v1108, %v1124
      %v1132 = vadd.f32 %v1113, %v1124
      %v1133 = vadd.f32 %v1116, %v1124
      %v1134 = vtanh.pop %v1126
      %v1135 = vtanh.pop %v1127
      %v1136 = vtanh.pop %v1128
      %v1137 = vtanh.pop %v1129
      %v1138 = vtanh.pop %v1130
      %v1139 = vtanh.pop %v1131
      %v1140 = vtanh.pop %v1132
      %v1141 = vtanh.pop %v1133
      %1142 = vst.msk [vmem:[%s398] sm:$0xff] %vm437, %v1134
      %1143 = vst.msk [vmem:[%s398 + $0x8] sm:$0xff] %vm437, %v1135
      %1144 = vst.msk [vmem:[%s398 + $0x10] sm:$0xff] %vm437, %v1136
      %1145 = vst.msk [vmem:[%s398 + $0x18] sm:$0xff] %vm437, %v1137
      %1146 = vst.msk [vmem:[%s398 + $0x20] sm:$0xff] %vm437, %v1138
      %1147 = vst.msk [vmem:[%s398 + $0x28] sm:$0xff] %vm437, %v1139
      %1148 = vst.msk [vmem:[%s398 + $0x30] sm:$0xff] %vm437, %v1140
      %1149 = vst.msk [vmem:[%s398 + $0x38] sm:$0xff] %vm437, %v1141
      %s1150 = smul.u32 8, %s25
      %p1151 = scmp.lt.s32.totalorder %s24, 1
      %s1152 = scalar_select %p1151, %s24, 1
      %p1153 = scmp.lt.s32.totalorder %s1150, 7
      %s1154 = scalar_select %p1153, %s1150, 7
      %s1155 = smul.addr %s1152, 8
      %s1156 = sadd.s32 %s1154, %s1155
      %s1157 = smul.addr %s1156, 8
      %s1158 = scalar_lea.vmem %s9, %s1157
      // Predicated region
      $region57: #{tpu_custom_call.1} parent=55 // pred_check
        %p1159 = pneg %p258
      $region58: #{tpu_custom_call.1} parent=55 // pred_check_branch
        %1161 = sbr.rel (%p1159) target = $region60
      $region59: #{tpu_custom_call.1} parent=55 // pred_region
        %s1162 = smul.u32 8, %s25
      $region60: #{tpu_custom_call.1} parent=55 // pred_fallthru
        _
    $region56: #{tpu_custom_call.1} parent=5 // pred_fallthru
      _
    %p1163 = scmp.le.s32.totalorder 2, %s15
    // Predicated region
    $region61: #{tpu_custom_call.1} parent=5 // pred_check
      %p1164 = pneg %p1163
    $region62: #{tpu_custom_call.1} parent=5 // pred_check_branch
      %1166 = sbr.rel (%p1164) target = $region64
    $region63: #{tpu_custom_call.1} parent=5 // pred_region
      %s1167 = ssub.s32 %s15, 2
      // Predicated region
      $region65: #{tpu_custom_call.1} parent=63 // pred_check
        %p1168 = pneg %p264
      $region66: #{tpu_custom_call.1} parent=63 // pred_check_branch
        %1170 = sbr.rel (%p1168) target = $region68
      $region67: #{tpu_custom_call.1} parent=63 // pred_region
        %s1171 = smul.u32 8, %s27
        %p1172 = scmp.lt.s32.totalorder %s26, 1
        %s1173 = scalar_select %p1172, %s26, 1
        %p1174 = scmp.lt.s32.totalorder %s1171, 7
        %s1175 = scalar_select %p1174, %s1171, 7
        %s1176 = smul.addr %s1173, 8
        %s1177 = sadd.s32 %s1175, %s1176
        %s1178 = smul.addr %s1177, 8
        %s1179 = scalar_lea.vmem %s9, %s1178
      $region68: #{tpu_custom_call.1} parent=63 // pred_fallthru
        _
    $region64: #{tpu_custom_call.1} parent=5 // pred_fallthru
      _
  $region6: #{tpu_custom_call.1} parent=0 // loop_footer
    %s19 = sadd.s32 1, %s15
  $region7: #{tpu_custom_call.1} parent=0 // loop_footer_branch
    %14 = sbr.rel target = $region3
  $region8: #{tpu_custom_call.1} parent=0 // loop_exit
    _

</llo_original>
